<compile_context>
chip_gen: v5e
topology: v5e:2x2
jax: 0.10.0
libtpu: 0.0.40
codegen_flags: <defaults>
</compile_context>

<pallas_src>
import functools

import jax
import jax.numpy as jnp
from jax.experimental import pallas as pl
from jax.experimental.pallas import tpu as pltpu


def _round_up(x, m):
    return (x + m - 1) // m * m


def _decoder_fused_kernel(x_ref, *refs, num_hidden, use_sigmoid):
    """One grid step pushes a (TB, Fin) slab of rows through the whole MLP.

    refs = (w1, b1, w2, b2, ..., w_last, b_last, o_ref).
    All intermediates stay on-chip as values; only the final (TB, output_size)
    tile is written back to HBM.
    """
    o_ref = refs[-1]
    wb = refs[:-1]

    h = x_ref[...]                                   # bf16 (or fp32) rows straight off HBM

    for i in range(num_hidden + 1):
        w_ref, b_ref = wb[2 * i], wb[2 * i + 1]
        h = jnp.dot(h.astype(jnp.bfloat16), w_ref[...],      # bf16 MXU matmul
                    preferred_element_type=jnp.float32)       # fp32 accumulate
        h = h + b_ref[...]                                    # fp32 epilogue
        if i < num_hidden:
            h = jnp.maximum(h, 0.0)                           # ReLU (hidden layers only)

    if use_sigmoid:
        h = jax.nn.sigmoid(h)                                 # exp -> EUP slot

    o_ref[...] = h.astype(o_ref.dtype)


def decoder_forward(params, x, use_sigmoid=True):
    """Single fused pallas_call over a batch-tiled grid; weights stay resident."""
    B, Fin = x.shape
    layers = list(params["layers"]) + [params["last"]]
    num_hidden = len(params["layers"])
    Fout = layers[-1][0].shape[1]

    # Batch tile selection:
    #   - as large as 2048 rows to amortize per-step overhead (DMA-efficiency driven),
    #   - capped at round_up(cdiv(B,2), 256) so large batches always give >=2 grid
    #     steps for v7x's 2-TensorCore sharding of the "parallel" axis,
    #   - never larger than the 16-rounded batch (16-row sublane tile for bf16 x),
    #   - at least 16 rows.
    TB = max(16, min(2048,
                     _round_up(pl.cdiv(B, 2), 256),
                     _round_up(B, 16)))
    grid = (pl.cdiv(B, TB),)   # ragged last block is fine: ops are row-wise, OOB writes dropped

    flat_wb, wb_specs = [], []
    for w, b in layers:
        flat_wb += [w, b]
        # Constant index_map: weights/biases DMA'd once, resident in VMEM across steps.
        wb_specs += [pl.BlockSpec(w.shape, lambda i: (0, 0)),
                     pl.BlockSpec(b.shape, lambda i: (0, 0))]

    kernel = functools.partial(_decoder_fused_kernel,
                               num_hidden=num_hidden,
                               use_sigmoid=use_sigmoid)
    out = pl.pallas_call(
        kernel,
        out_shape=jax.ShapeDtypeStruct((B, Fout), jnp.float32),
        grid=grid,
        in_specs=[pl.BlockSpec((TB, Fin), lambda i: (i, 0))] + wb_specs,
        out_specs=pl.BlockSpec((TB, Fout), lambda i: (i, 0)),
        compiler_params=pltpu.CompilerParams(
            dimension_semantics=("parallel",)),   # v7x: shard batch over 2 TCs
    )(x, *flat_wb)
    return out


def xavier_uniform(key, fan_in, fan_out, dtype=jnp.float32):
    """Deterministic xavier_uniform init; returns (fan_in, fan_out) matrix."""
    limit = (6.0 / (fan_in + fan_out)) ** 0.5
    w = jax.random.uniform(key, (fan_in, fan_out), dtype=jnp.float32,
                           minval=-limit, maxval=limit)
    return w.astype(dtype)


def make_decoder_params(key, in_features, num_layers, output_size):
    """Weight/bias pytree. Weights bf16 (MXU-native), biases fp32 (small random)."""
    params = {"layers": [], "last": None}
    feat = in_features
    for _ in range(num_layers):
        key, kw, kb = jax.random.split(key, 3)
        out_feat = feat // 2
        w = xavier_uniform(kw, feat, out_feat, dtype=jnp.bfloat16)
        b = 0.05 * jax.random.normal(kb, (1, out_feat), jnp.float32)
        params["layers"].append((w, b))
        feat = out_feat
    key, kw, kb = jax.random.split(key, 3)
    params["last"] = (xavier_uniform(kw, feat, output_size, dtype=jnp.bfloat16),
                      0.05 * jax.random.normal(kb, (1, output_size), jnp.float32))
    return params


def decoder_reference(params, x, use_sigmoid=True):
    """Pure-JAX reference using the same bf16-matmul / fp32-accumulate recipe.

    Note: this validates self-consistency of the Pallas kernel; parity with an
    all-fp32 PyTorch Decoder carries the usual ~1e-2-level bf16 drift.
    """
    h = x
    for w, b in params["layers"]:
        h = jnp.dot(h.astype(jnp.bfloat16), w,
                    preferred_element_type=jnp.float32) + b
        h = jnp.maximum(h, 0.0)
    w, b = params["last"]
    y = jnp.dot(h.astype(jnp.bfloat16), w,
                preferred_element_type=jnp.float32) + b
    if use_sigmoid:
        y = jax.nn.sigmoid(y)
    return y


if __name__ == "__main__":
    key = jax.random.PRNGKey(0)

    # Synthetic module configuration (small shapes).
    encoder_embedding_last = 64
    in_features = 2 * encoder_embedding_last          # feature_aggregation = None
    num_decoder_layers = 2                            # 128 -> 64 -> 32
    output_size = 8
    batch = 16

    key, kx, kp = jax.random.split(key, 3)
    # Producer-side bf16 activations: halves the dominant HBM read traffic.
    x = jax.random.normal(kx, (batch, in_features), jnp.float32).astype(jnp.bfloat16)
    params = make_decoder_params(kp, in_features, num_decoder_layers, output_size)

    out = decoder_forward(params, x, use_sigmoid=True)
    out = jax.block_until_ready(out)

    ref = decoder_reference(params, x, use_sigmoid=True)
    assert out.shape == (batch, output_size), out.shape
    assert jnp.allclose(out, ref, atol=1e-2, rtol=1e-2), "mismatch vs reference"

    print("KERNEL_OK")
</pallas_src>

<mosaic_0001>
module attributes {stable_mosaic.version = 11 : i64} {
  func.func @_decoder_fused_kernel(%arg0: i32, %arg1: memref<16x128xbf16, #tpu.memory_space<vmem>>, %arg2: memref<128x64xbf16, #tpu.memory_space<vmem>>, %arg3: memref<1x64xf32, #tpu.memory_space<vmem>>, %arg4: memref<64x32xbf16, #tpu.memory_space<vmem>>, %arg5: memref<1x32xf32, #tpu.memory_space<vmem>>, %arg6: memref<32x8xbf16, #tpu.memory_space<vmem>>, %arg7: memref<1x8xf32, #tpu.memory_space<vmem>>, %arg8: memref<16x8xf32, #tpu.memory_space<vmem>>) attributes {dimension_semantics = [#tpu.dimension_semantics<parallel>], iteration_bounds = array<i64: 1>, scalar_prefetch = 0 : i64, scratch_operands = 0 : i64, tpu.core_type = #tpu.core_type<tc>, window_params = [{transform_indices = @transform_0, window_bounds = array<i64: 16, 128>}, {pipeline_mode = #tpu.pipeline_mode<synchronous>, transform_indices = @transform_1, window_bounds = array<i64: 128, 64>}, {pipeline_mode = #tpu.pipeline_mode<synchronous>, transform_indices = @transform_2, window_bounds = array<i64: 1, 64>}, {pipeline_mode = #tpu.pipeline_mode<synchronous>, transform_indices = @transform_3, window_bounds = array<i64: 64, 32>}, {pipeline_mode = #tpu.pipeline_mode<synchronous>, transform_indices = @transform_4, window_bounds = array<i64: 1, 32>}, {pipeline_mode = #tpu.pipeline_mode<synchronous>, transform_indices = @transform_5, window_bounds = array<i64: 32, 8>}, {pipeline_mode = #tpu.pipeline_mode<synchronous>, transform_indices = @transform_6, window_bounds = array<i64: 1, 8>}, {transform_indices = @transform_7, window_bounds = array<i64: 16, 8>}]} {
    %c0 = arith.constant 0 : index
    %c0_0 = arith.constant 0 : index
    %0 = vector.load %arg1[%c0, %c0_0] : memref<16x128xbf16, #tpu.memory_space<vmem>>, vector<16x128xbf16>
    %c0_1 = arith.constant 0 : index
    %c0_2 = arith.constant 0 : index
    %1 = vector.load %arg2[%c0_1, %c0_2] : memref<128x64xbf16, #tpu.memory_space<vmem>>, vector<128x64xbf16>
    %cst = arith.constant dense<0.000000e+00> : vector<16x64xf32>
    %2 = tpu.matmul %0, %1, %cst {dimension_numbers = #tpu.dot_dimension_numbers<[1], [0], [0], [1], [0, 0, 1, 1], [], []>} : vector<16x128xbf16>, vector<128x64xbf16>, vector<16x64xf32> -> vector<16x64xf32>
    %c0_3 = arith.constant 0 : index
    %c0_4 = arith.constant 0 : index
    %3 = vector.load %arg3[%c0_3, %c0_4] : memref<1x64xf32, #tpu.memory_space<vmem>>, vector<1x64xf32>
    %4 = vector.broadcast %3 : vector<1x64xf32> to vector<16x64xf32>
    %5 = arith.addf %2, %4 : vector<16x64xf32>
    %cst_5 = arith.constant 0.000000e+00 : f32
    %6 = vector.broadcast %cst_5 : f32 to vector<16x64xf32>
    %7 = arith.maximumf %5, %6 : vector<16x64xf32>
    %8 = arith.truncf %7 : vector<16x64xf32> to vector<16x64xbf16>
    %c0_6 = arith.constant 0 : index
    %c0_7 = arith.constant 0 : index
    %9 = vector.load %arg4[%c0_6, %c0_7] : memref<64x32xbf16, #tpu.memory_space<vmem>>, vector<64x32xbf16>
    %cst_8 = arith.constant dense<0.000000e+00> : vector<16x32xf32>
    %10 = tpu.matmul %8, %9, %cst_8 {dimension_numbers = #tpu.dot_dimension_numbers<[1], [0], [0], [1], [0, 0, 1, 1], [], []>} : vector<16x64xbf16>, vector<64x32xbf16>, vector<16x32xf32> -> vector<16x32xf32>
    %c0_9 = arith.constant 0 : index
    %c0_10 = arith.constant 0 : index
    %11 = vector.load %arg5[%c0_9, %c0_10] : memref<1x32xf32, #tpu.memory_space<vmem>>, vector<1x32xf32>
    %12 = vector.broadcast %11 : vector<1x32xf32> to vector<16x32xf32>
    %13 = arith.addf %10, %12 : vector<16x32xf32>
    %cst_11 = arith.constant 0.000000e+00 : f32
    %14 = vector.broadcast %cst_11 : f32 to vector<16x32xf32>
    %15 = arith.maximumf %13, %14 : vector<16x32xf32>
    %16 = arith.truncf %15 : vector<16x32xf32> to vector<16x32xbf16>
    %c0_12 = arith.constant 0 : index
    %c0_13 = arith.constant 0 : index
    %17 = vector.load %arg6[%c0_12, %c0_13] : memref<32x8xbf16, #tpu.memory_space<vmem>>, vector<32x8xbf16>
    %cst_14 = arith.constant dense<0.000000e+00> : vector<16x8xf32>
    %18 = tpu.matmul %16, %17, %cst_14 {dimension_numbers = #tpu.dot_dimension_numbers<[1], [0], [0], [1], [0, 0, 1, 1], [], []>} : vector<16x32xbf16>, vector<32x8xbf16>, vector<16x8xf32> -> vector<16x8xf32>
    %c0_15 = arith.constant 0 : index
    %c0_16 = arith.constant 0 : index
    %19 = vector.load %arg7[%c0_15, %c0_16] : memref<1x8xf32, #tpu.memory_space<vmem>>, vector<1x8xf32>
    %20 = vector.broadcast %19 : vector<1x8xf32> to vector<16x8xf32>
    %21 = arith.addf %18, %20 : vector<16x8xf32>
    %22 = arith.negf %21 : vector<16x8xf32>
    %23 = math.exp %22 : vector<16x8xf32>
    %cst_17 = arith.constant 1.000000e+00 : f32
    %24 = vector.broadcast %cst_17 : f32 to vector<16x8xf32>
    %25 = arith.addf %24, %23 : vector<16x8xf32>
    %26 = arith.divf %24, %25 : vector<16x8xf32>
    %c0_18 = arith.constant 0 : index
    %c0_19 = arith.constant 0 : index
    %27 = vector.load %arg8[%c0_18, %c0_19] : memref<16x8xf32, #tpu.memory_space<vmem>>, vector<16x8xf32>
    tpu.vector_store %arg8[%c0_18, %c0_19], %26 {strides = array<i32>} : memref<16x8xf32, #tpu.memory_space<vmem>>, vector<16x8xf32>,
    return
  }
  func.func @transform_0(%arg0: i32) -> (i32, i32) {
    %c0_i32 = arith.constant 0 : i32
    %c0_i32_0 = arith.constant 0 : i32
    return %arg0, %c0_i32 : i32, i32
  }
  func.func @transform_1(%arg0: i32) -> (i32, i32) {
    %c0_i32 = arith.constant 0 : i32
    %c0_i32_0 = arith.constant 0 : i32
    %c0_i32_1 = arith.constant 0 : i32
    return %c0_i32, %c0_i32_0 : i32, i32
  }
  func.func @transform_2(%arg0: i32) -> (i32, i32) {
    %c0_i32 = arith.constant 0 : i32
    %c0_i32_0 = arith.constant 0 : i32
    %c0_i32_1 = arith.constant 0 : i32
    return %c0_i32, %c0_i32_0 : i32, i32
  }
  func.func @transform_3(%arg0: i32) -> (i32, i32) {
    %c0_i32 = arith.constant 0 : i32
    %c0_i32_0 = arith.constant 0 : i32
    %c0_i32_1 = arith.constant 0 : i32
    return %c0_i32, %c0_i32_0 : i32, i32
  }
  func.func @transform_4(%arg0: i32) -> (i32, i32) {
    %c0_i32 = arith.constant 0 : i32
    %c0_i32_0 = arith.constant 0 : i32
    %c0_i32_1 = arith.constant 0 : i32
    return %c0_i32, %c0_i32_0 : i32, i32
  }
  func.func @transform_5(%arg0: i32) -> (i32, i32) {
    %c0_i32 = arith.constant 0 : i32
    %c0_i32_0 = arith.constant 0 : i32
    %c0_i32_1 = arith.constant 0 : i32
    return %c0_i32, %c0_i32_0 : i32, i32
  }
  func.func @transform_6(%arg0: i32) -> (i32, i32) {
    %c0_i32 = arith.constant 0 : i32
    %c0_i32_0 = arith.constant 0 : i32
    %c0_i32_1 = arith.constant 0 : i32
    return %c0_i32, %c0_i32_0 : i32, i32
  }
  func.func @transform_7(%arg0: i32) -> (i32, i32) {
    %c0_i32 = arith.constant 0 : i32
    %c0_i32_0 = arith.constant 0 : i32
    return %arg0, %c0_i32 : i32, i32
  }
}

</mosaic_0001>

<llo_original>
// kernel: tpu_custom_call.1
$region0: #{tpu_custom_call.1}
  #allocation0 [shape = 'u32[]', space=smem, size = 0x4, offset = 0x4, fixed_abs, tag = 'smem constant byte address 0x4 - core index']
  #allocation1 [shape = 'u32[72,128]{1,0:T(1,128)}', space=vmem, size = 0x9000, scoped, tag = 'internal scratch']
  %s0 = inlined_call_operand.vmem [shape: bf16[16,128], index: 0, kind: input, shape index: {}]
  %s1 = inlined_call_operand.vmem [shape: bf16[128,64], index: 1, kind: input, shape index: {}]
  %s2 = inlined_call_operand.vmem [shape: f32[1,64], index: 2, kind: input, shape index: {}]
  %s3 = inlined_call_operand.vmem [shape: bf16[64,32], index: 3, kind: input, shape index: {}]
  %s4 = inlined_call_operand.vmem [shape: f32[1,32], index: 4, kind: input, shape index: {}]
  %s5 = inlined_call_operand.vmem [shape: bf16[32,8], index: 5, kind: input, shape index: {}]
  %s6 = inlined_call_operand.vmem [shape: f32[1,8], index: 6, kind: input, shape index: {}]
  %s7 = inlined_call_operand.vmem [shape: f32[16,8], index: 7, kind: output, shape index: {}]
  %s8 = sld [smem:[#allocation0]]
  $region38: #{tpu_custom_call.1} parent=0
    _
  %s10 = ssub.s32 1, %s8
  %s11 = scalar_select 0, %s10, %s8
  // Predicated region
  $region2: #{tpu_custom_call.1} parent=0 // pred_check
    _
  $region3: #{tpu_custom_call.1} parent=0 // pred_check_branch
    %13 = sbr.rel (0) target = $region5
  $region4: #{tpu_custom_call.1} parent=0 // pred_region
    _
  $region5: #{tpu_custom_call.1} parent=0 // pred_fallthru
    _
  // Predicated region
  $region6: #{tpu_custom_call.1} parent=0 // pred_check
    _
  $region7: #{tpu_custom_call.1} parent=0 // pred_check_branch
    %15 = sbr.rel (0) target = $region9
  $region8: #{tpu_custom_call.1} parent=0 // pred_region
    _
  $region9: #{tpu_custom_call.1} parent=0 // pred_fallthru
    _
  // Predicated region
  $region10: #{tpu_custom_call.1} parent=0 // pred_check
    _
  $region11: #{tpu_custom_call.1} parent=0 // pred_check_branch
    %17 = sbr.rel (0) target = $region13
  $region12: #{tpu_custom_call.1} parent=0 // pred_region
    _
  $region13: #{tpu_custom_call.1} parent=0 // pred_fallthru
    _
  // Predicated region
  $region14: #{tpu_custom_call.1} parent=0 // pred_check
    _
  $region15: #{tpu_custom_call.1} parent=0 // pred_check_branch
    %19 = sbr.rel (0) target = $region17
  $region16: #{tpu_custom_call.1} parent=0 // pred_region
    _
  $region17: #{tpu_custom_call.1} parent=0 // pred_fallthru
    _
  // Predicated region
  $region18: #{tpu_custom_call.1} parent=0 // pred_check
    _
  $region19: #{tpu_custom_call.1} parent=0 // pred_check_branch
    %21 = sbr.rel (0) target = $region21
  $region20: #{tpu_custom_call.1} parent=0 // pred_region
    _
  $region21: #{tpu_custom_call.1} parent=0 // pred_fallthru
    _
  // Predicated region
  $region22: #{tpu_custom_call.1} parent=0 // pred_check
    _
  $region23: #{tpu_custom_call.1} parent=0 // pred_check_branch
    %23 = sbr.rel (0) target = $region25
  $region24: #{tpu_custom_call.1} parent=0 // pred_region
    _
  $region25: #{tpu_custom_call.1} parent=0 // pred_fallthru
    _
  // Predicated region
  $region26: #{tpu_custom_call.1} parent=0 // pred_check
    _
  $region27: #{tpu_custom_call.1} parent=0 // pred_check_branch
    %25 = sbr.rel (0) target = $region29
  $region28: #{tpu_custom_call.1} parent=0 // pred_region
    _
  $region29: #{tpu_custom_call.1} parent=0 // pred_fallthru
    _
  %v27 = vld [vmem:[%s0] sm:$0xf]
  %v28 = vld [vmem:[%s0 + $0x4] sm:$0xf]
  %v29 = vld [vmem:[%s1] sm:$0xf]
  %v30 = vld [vmem:[%s1 + $0x4] sm:$0xf]
  %v31 = vld [vmem:[%s1 + $0x8] sm:$0xf]
  %v32 = vld [vmem:[%s1 + $0xc] sm:$0xf]
  %v33 = vld [vmem:[%s1 + $0x10] sm:$0xf]
  %v34 = vld [vmem:[%s1 + $0x14] sm:$0xf]
  %v35 = vld [vmem:[%s1 + $0x18] sm:$0xf]
  %v36 = vld [vmem:[%s1 + $0x1c] sm:$0xf]
  %v37 = vld [vmem:[%s1 + $0x20] sm:$0xf]
  %v38 = vld [vmem:[%s1 + $0x24] sm:$0xf]
  %v39 = vld [vmem:[%s1 + $0x28] sm:$0xf]
  %v40 = vld [vmem:[%s1 + $0x2c] sm:$0xf]
  %v41 = vld [vmem:[%s1 + $0x30] sm:$0xf]
  %v42 = vld [vmem:[%s1 + $0x34] sm:$0xf]
  %v43 = vld [vmem:[%s1 + $0x38] sm:$0xf]
  %v44 = vld [vmem:[%s1 + $0x3c] sm:$0xf]
  %v45 = vld [vmem:[%s2] sm:$0x1]
  %v47 = vperm.slane %v45, 0
  %v51 = vunpack.c.l.b16 %v27
  %v52 = vunpack.c.l.b16 %v28
  %v53 = vpack.c.b16 %v52, %v51
  %v71 = vunpack.c.l.b16 %v29
  %v72 = vunpack.c.l.b16 %v30
  %v73 = vunpack.c.l.b16 %v31
  %v74 = vunpack.c.l.b16 %v32
  %v75 = vunpack.c.l.b16 %v33
  %v76 = vunpack.c.l.b16 %v34
  %v77 = vunpack.c.l.b16 %v35
  %v78 = vunpack.c.l.b16 %v36
  %v79 = vunpack.c.l.b16 %v37
  %v80 = vunpack.c.l.b16 %v38
  %v81 = vunpack.c.l.b16 %v39
  %v82 = vunpack.c.l.b16 %v40
  %v83 = vunpack.c.l.b16 %v41
  %v84 = vunpack.c.l.b16 %v42
  %v85 = vunpack.c.l.b16 %v43
  %v86 = vunpack.c.l.b16 %v44
  %v87 = vpack.c.b16 %v72, %v71
  %v88 = vpack.c.b16 %v74, %v73
  %v89 = vpack.c.b16 %v76, %v75
  %v90 = vpack.c.b16 %v78, %v77
  %v91 = vpack.c.b16 %v80, %v79
  %v92 = vpack.c.b16 %v82, %v81
  %v93 = vpack.c.b16 %v84, %v83
  %v94 = vpack.c.b16 %v86, %v85
  %103 = vmatpush.bf16.msra.mxu0 %v94
  %104 = vmatpush.bf16.msra.mxu0 %v93
  %105 = vmatpush.bf16.msra.mxu0 %v92
  %106 = vmatpush.bf16.msra.mxu0 %v91
  %107 = vmatpush.bf16.msra.mxu0 %v90
  %108 = vmatpush.bf16.msra.mxu0 %v89
  %109 = vmatpush.bf16.msra.mxu0 %v88
  %110 = vmatpush.bf16.msra.mxu0 %v87
  %111 = vmatmul.bf16.gmra.mxu0 %v53
  %v112 = vpop.f32.mrf.mxu0
  %v113 = vadd.f32 %v47, %v112
  %v114 = vpop.f32.mrf.mxu0
  %v115 = vadd.f32 %v47, %v114
  %116 = vdwg.mxu0
  %v117 = vmax.f32 %v113, 0.0
  %v118 = vmax.f32 %v115, 0.0
  %v119 = vpack.c.bf16 %v118, %v117
  %v120 = vld [vmem:[%s3] sm:$0xf]
  %v121 = vld [vmem:[%s3 + $0x4] sm:$0xf]
  %v122 = vld [vmem:[%s3 + $0x8] sm:$0xf]
  %v123 = vld [vmem:[%s3 + $0xc] sm:$0xf]
  %v124 = vld [vmem:[%s3 + $0x10] sm:$0xf]
  %v125 = vld [vmem:[%s3 + $0x14] sm:$0xf]
  %v126 = vld [vmem:[%s3 + $0x18] sm:$0xf]
  %v127 = vld [vmem:[%s3 + $0x1c] sm:$0xf]
  %v128 = vld [vmem:[%s4] sm:$0x1]
  %v130 = vperm.slane %v128, 0
  %v140 = vunpack.c.l.b16 %v120
  %v141 = vunpack.c.l.b16 %v121
  %v142 = vunpack.c.l.b16 %v122
  %v143 = vunpack.c.l.b16 %v123
  %v144 = vunpack.c.l.b16 %v124
  %v145 = vunpack.c.l.b16 %v125
  %v146 = vunpack.c.l.b16 %v126
  %v147 = vunpack.c.l.b16 %v127
  %v148 = vpack.c.b16 %v141, %v140
  %v149 = vpack.c.b16 %v143, %v142
  %v150 = vpack.c.b16 %v145, %v144
  %v151 = vpack.c.b16 %v147, %v146
  %vm156 = vcmask 523264
  %v158 = vsel %vm156, %v119, 0
  %160 = vmatpush.bf16.msra.mxu0 0
  %161 = vmatpush.bf16.msra.mxu0 0
  %162 = vmatpush.bf16.msra.mxu0 0
  %163 = vmatpush.bf16.msra.mxu0 0
  %164 = vmatpush.bf16.msra.mxu0 %v151
  %165 = vmatpush.bf16.msra.mxu0 %v150
  %166 = vmatpush.bf16.msra.mxu0 %v149
  %167 = vmatpush.bf16.msra.mxu0 %v148
  %168 = vmatmul.bf16.gmra.mxu0 %v158
  %v169 = vpop.f32.mrf.mxu0
  %v170 = vadd.f32 %v130, %v169
  %v171 = vpop.f32.mrf.mxu0
  %v172 = vadd.f32 %v130, %v171
  %173 = vdwg.mxu0
  %v174 = vmax.f32 %v170, 0.0
  %v175 = vmax.f32 %v172, 0.0
  %v176 = vpack.c.bf16 %v175, %v174
  %v177 = vld [vmem:[%s5] sm:$0xf]
  %v178 = vld [vmem:[%s5 + $0x4] sm:$0xf]
  %v179 = vld [vmem:[%s5 + $0x8] sm:$0xf]
  %v180 = vld [vmem:[%s5 + $0xc] sm:$0xf]
  %v181 = vld [vmem:[%s6] sm:$0x1]
  %v183 = vperm.slane %v181, 0
  %v189 = vunpack.c.l.b16 %v177
  %v190 = vunpack.c.l.b16 %v178
  %v191 = vunpack.c.l.b16 %v179
  %v192 = vunpack.c.l.b16 %v180
  %v193 = vpack.c.b16 %v190, %v189
  %v194 = vpack.c.b16 %v192, %v191
  %vm197 = vcmask 261120
  %v199 = vsel %vm197, %v176, 0
  %201 = vmatpush.bf16.msra.mxu0 0
  %202 = vmatpush.bf16.msra.mxu0 0
  %203 = vmatpush.bf16.msra.mxu0 0
  %204 = vmatpush.bf16.msra.mxu0 0
  %205 = vmatpush.bf16.msra.mxu0 0
  %206 = vmatpush.bf16.msra.mxu0 0
  %207 = vmatpush.bf16.msra.mxu0 %v194
  %208 = vmatpush.bf16.msra.mxu0 %v193
  %209 = vmatmul.bf16.gmra.mxu0 %v199
  %v210 = vpop.f32.mrf.mxu0
  %v211 = vadd.f32 %v183, %v210
  %v212 = vpop.f32.mrf.mxu0
  %v213 = vadd.f32 %v183, %v212
  %214 = vdwg.mxu0
  %v215 = vxor.u32 %v211, 2147483648
  %v216 = vxor.u32 %v213, 2147483648
  %v217 = vmul.f32 %v215, 1.442695
  %v218 = vpow.pop %v217
  %v219 = vmul.f32 %v216, 1.442695
  %v220 = vpow.pop %v219
  %v221 = vadd.f32 %v218, 1.0
  %v222 = vadd.f32 %v220, 1.0
  %v223 = vrcp.pop %v221
  %v224 = vmul.f32 %v221, %v223
  %v225 = vsub.f32 1.0, %v224
  %v226 = vmul.f32 %v223, %v225
  %v227 = vadd.f32 %v223, %v226
  %vm228 = vweird.f32 %v221
  %vm229 = vweird.f32 %v223
  %vm230 = vmor %vm228, %vm229
  %v231 = vsel %vm230, %v223, %v227
  %v232 = vand.u32 2147483647, %v221
  %vm233 = vcmp.eq.f32.partialorder %v232, 8.507059e+37
  %v234 = vand.u32 %v221, 2147483648
  %v235 = vor.u32 1.1754944e-38, %v234
  %v236 = vsel %vm233, %v235, %v231
  %v237 = vmul.f32 1.0, %v236
  %v238 = vrcp.pop %v222
  %v239 = vmul.f32 %v222, %v238
  %v240 = vsub.f32 1.0, %v239
  %v241 = vmul.f32 %v238, %v240
  %v242 = vadd.f32 %v238, %v241
  %vm243 = vweird.f32 %v222
  %vm244 = vweird.f32 %v238
  %vm245 = vmor %vm243, %vm244
  %v246 = vsel %vm245, %v238, %v242
  %v247 = vand.u32 2147483647, %v222
  %vm248 = vcmp.eq.f32.partialorder %v247, 8.507059e+37
  %v249 = vand.u32 %v222, 2147483648
  %v250 = vor.u32 1.1754944e-38, %v249
  %v251 = vsel %vm248, %v250, %v246
  %v252 = vmul.f32 1.0, %v251
  %vm253 = vcmask 64512
  %254 = vst.msk [vmem:[%s7] sm:$0xff] %vm253, %v237
  %255 = vst.msk [vmem:[%s7 + $0x8] sm:$0xff] %vm253, %v252
  // Predicated region
  $region30: #{tpu_custom_call.1} parent=0 // pred_check
    _
  $region31: #{tpu_custom_call.1} parent=0 // pred_check_branch
    %257 = sbr.rel (0) target = $region33
  $region32: #{tpu_custom_call.1} parent=0 // pred_region
    _
  $region33: #{tpu_custom_call.1} parent=0 // pred_fallthru
    _
  // Predicated region
  $region34: #{tpu_custom_call.1} parent=0 // pred_check
    _
  $region35: #{tpu_custom_call.1} parent=0 // pred_check_branch
    %259 = sbr.rel (0) target = $region37
  $region36: #{tpu_custom_call.1} parent=0 // pred_region
    _
  $region37: #{tpu_custom_call.1} parent=0 // pred_fallthru
    _

</llo_original>
